<compile_context>
chip_gen: v7x
topology: tpu7x:2x2x1
jax: 0.10.0
libtpu: 0.0.40
codegen_flags: <defaults>
</compile_context>

<pallas_src>
from functools import partial

import jax
import jax.numpy as jnp
from jax.experimental import pallas as pl
from jax.experimental.pallas import tpu as pltpu


def _round_up(n, m):
    return ((n + m - 1) // m) * m


def _reg_density_kernel(t_ref, x_ref, w1_ref, wt_ref, b1_ref, b2_ref, rhs_ref,
                        s_ref, out_ref, *, d_col, dp):
    """One batch tile of the fused dynamics + exact divergence + regularizers.

    rhs_ref holds the block-diagonal [[W2, 0], [0, M]] so dx/dt and g@M come out
    of a single 2*Hp-deep contraction.  The three per-batch scalars are packed
    into padded columns d_col, d_col+1, d_col+2 of the lane-dense output slab.
    """
    t = t_ref[0, 0]                                                   # SMEM scalar
    x = x_ref[...]                                                    # [TB, D]

    # hidden activation; time bias fused in-kernel (free VPU work under MXU slack)
    pre = jnp.dot(x, w1_ref[...], preferred_element_type=jnp.float32)
    h = jnp.tanh(pre + t * wt_ref[...] + b1_ref[...])                 # [TB, Hp]
    g = 1.0 - h * h                                                   # [TB, Hp]

    # fused contraction: [h | g] @ [[W2, 0], [0, M]]  -> [dx_raw | g@M]
    hg = jnp.concatenate([h, g], axis=-1)                             # [TB, 2*Hp]
    dxgm = jnp.dot(hg, rhs_ref[...], preferred_element_type=jnp.float32)
    dx = dxgm[:, :dp] + b2_ref[...]                                   # [TB, Dp]
    gm = dxgm[:, dp:]                                                 # [TB, Hp]

    # exact divergence: trace(J) = sum_h g_h * s_h    (s precomputed, [1, Hp])
    div = jnp.sum(g * s_ref[...], axis=-1, keepdims=True)             # [TB, 1]
    # kinetic-energy regularizer derivative: |dx/dt|^2 (padded dx cols are 0)
    kin = jnp.sum(dx * dx, axis=-1, keepdims=True)                    # [TB, 1]
    # Frobenius regularizer derivative: ||J||_F^2 = g^T M g
    frob = jnp.sum(g * gm, axis=-1, keepdims=True)                    # [TB, 1]

    # pack into one lane-dense output slab:
    #   cols [0, d_col) -> dx/dt   | d_col -> -dlogp | +1 -> |dx|^2 | +2 -> ||J||_F^2
    # padded dx columns are exactly zero, so plain selects (no adds) suffice.
    lane = jax.lax.broadcasted_iota(jnp.int32, dx.shape, 1)
    off = lane - d_col
    packed = jnp.where(off == 0, -div, dx)
    packed = jnp.where(off == 1, kin, packed)
    packed = jnp.where(off == 2, frob, packed)
    out_ref[...] = packed.astype(out_ref.dtype)


@jax.jit
def _regularized_density_forward(t, x, w1p, wtp, b1p, b2p, rhsp, sp):
    """Jitted forward: no input padding, single fused pallas_call, unpack outputs."""
    B, D = x.shape
    Hp = w1p.shape[1]
    Dp = b2p.shape[1]

    t_arr = jnp.asarray(t, jnp.float32).reshape(1, 1)   # SMEM scalar

    # Batch tiling:
    #   B <= 8      -> single full-dim tile
    #   B <= 512    -> split into (at least) two "parallel" steps so both v7x
    #                  TensorCores get work
    #   B  > 512    -> 256-row tiles (amortizes ~0.35us/step, big MXU M dim)
    # NOTE: callers with many distinct batch sizes should bucket B outside this
    # function to avoid retracing the jitted wrapper per distinct shape.
    if B <= 8:
        TB = B
    elif B <= 512:
        TB = min(_round_up(pl.cdiv(B, 2), 8), 256)
    else:
        TB = 256
    grid = (pl.cdiv(B, TB),)

    out = pl.pallas_call(
        partial(_reg_density_kernel, d_col=D, dp=Dp),
        out_shape=jax.ShapeDtypeStruct((B, Dp), jnp.float32),
        grid=grid,
        in_specs=[
            pl.BlockSpec(memory_space=pltpu.MemorySpace.SMEM),       # t  (1,1)
            pl.BlockSpec((TB, D), lambda i: (i, 0)),                 # x  (unpadded)
            pl.BlockSpec((D, Hp), lambda i: (0, 0)),                 # W1 (rows unpadded)
            pl.BlockSpec((1, Hp), lambda i: (0, 0)),                 # Wt
            pl.BlockSpec((1, Hp), lambda i: (0, 0)),                 # b1
            pl.BlockSpec((1, Dp), lambda i: (0, 0)),                 # b2
            pl.BlockSpec((2 * Hp, Dp + Hp), lambda i: (0, 0)),       # blockdiag(W2, M)
            pl.BlockSpec((1, Hp), lambda i: (0, 0)),                 # s = diag contraction
        ],
        out_specs=pl.BlockSpec((TB, Dp), lambda i: (i, 0)),
        compiler_params=pltpu.CompilerParams(
            dimension_semantics=("parallel",)),
    )(t_arr, x, w1p, wtp, b1p, b2p, rhsp, sp)

    dx = out[:, :D]
    neg_dlogp = out[:, D:D + 1]
    kin = out[:, D + 1:D + 2]
    frob = out[:, D + 2:D + 3]
    return dx, neg_dlogp, kin, frob


class RegularizedDensityDynamics:
    """JAX/Pallas port of RegularizedDensityDynamics wrapping an MLP dynamics
    with exact divergence and RNODE-style regularizer derivatives.

    forward(t, state) with state = (x, logp, r_kin, r_frob);
    returns (dx/dt, -dlogp, t3, t4)."""

    def __init__(self, params):
        # params: (W1 [D, H], Wt [1, H], b1 [1, H], W2 [H, D], b2 [1, D])
        w1, wt, b1, w2, b2 = [jnp.asarray(p, jnp.float32) for p in params]
        D, H = w1.shape

        # Lane-pad the hidden/output feature dims; keep >= 3 spare columns in Dp
        # to pack the three per-batch scalars into the dx output slab.
        Dp = _round_up(D, 128)
        if Dp - D < 3:
            Dp += 128
        Hp = _round_up(H, 128)

        # Invariant (correctness): padded hidden lanes have h=0, g=1, so every
        # per-lane constant (Wt, b1, s, M rows/cols, W2 rows) MUST stay zero
        # beyond H, and W2/b2 columns beyond D must stay zero so padded dx
        # columns are exactly 0 (kin and the packing selects rely on it).
        w1p = jnp.zeros((D, Hp), jnp.float32).at[:, :H].set(w1)
        wtp = jnp.zeros((1, Hp), jnp.float32).at[:, :H].set(wt)
        b1p = jnp.zeros((1, Hp), jnp.float32).at[:, :H].set(b1)
        b2p = jnp.zeros((1, Dp), jnp.float32).at[:, :D].set(b2)

        # constant divergence contraction s_h = sum_j W1[j,h] * W2[h,j]
        sp = jnp.zeros((1, Hp), jnp.float32).at[:, :H].set(
            jnp.sum(w1 * w2.T, axis=0, keepdims=True))

        # fused block-diagonal RHS [[W2, 0], [0, M]] with M = (W1^T W1) ∘ (W2 W2^T)
        m = (w1.T @ w1) * (w2 @ w2.T)
        rhsp = jnp.zeros((2 * Hp, Dp + Hp), jnp.float32)
        rhsp = rhsp.at[:H, :D].set(w2)
        rhsp = rhsp.at[Hp:Hp + H, Dp:Dp + H].set(m)

        self._padded = (w1p, wtp, b1p, b2p, rhsp, sp)
        self._n_evals = 0

    def forward(self, t, state):
        *xs, _logp, _r_kin, _r_frob = state   # strip density + regularizer channels
        (x,) = xs
        self._n_evals += 1                    # Python-side counter, not traced
        dx, neg_dlogp, dkin, dfrob = _regularized_density_forward(
            t, x, *self._padded)
        return (dx, neg_dlogp, dkin, dfrob)


def _reference_forward(t, x, params):
    """Pure-JAX reference (explicit per-batch Jacobian) for correctness checking."""
    w1, wt, b1, w2, b2 = params
    pre = x @ w1 + t * wt + b1
    h = jnp.tanh(pre)
    g = 1.0 - h * h
    dx = h @ w2 + b2
    # exact per-batch Jacobian J[b, i, j] = sum_h W1[i,h] g[b,h] W2[h,j]
    J = jnp.einsum('ih,bh,hj->bij', w1, g, w2)
    dlogp = jnp.trace(J, axis1=1, axis2=2)[:, None]
    kin = jnp.sum(dx * dx, axis=-1, keepdims=True)
    frob = jnp.sum(J * J, axis=(1, 2))[:, None]
    return dx, -dlogp, kin, frob


if __name__ == "__main__":
    B, D, H = 16, 32, 64   # n_batch, n_dimensions, hidden width

    key = jax.random.PRNGKey(0)
    k_x, k_w1, k_wt, k_b1, k_w2, k_b2 = jax.random.split(key, 6)

    # deterministic synthetic parameters (no checkpoint load)
    w1 = 0.1 * jax.random.normal(k_w1, (D, H), jnp.float32)
    wt = 0.1 * jax.random.normal(k_wt, (1, H), jnp.float32)
    b1 = 0.1 * jax.random.normal(k_b1, (1, H), jnp.float32)
    w2 = 0.1 * jax.random.normal(k_w2, (H, D), jnp.float32)
    b2 = 0.1 * jax.random.normal(k_b2, (1, D), jnp.float32)
    params = (w1, wt, b1, w2, b2)

    x = jax.random.normal(k_x, (B, D), jnp.float32)
    logp = jnp.zeros((B, 1), jnp.float32)       # log-density channel
    r_kin = jnp.zeros((B, 1), jnp.float32)      # kinetic-energy regularizer channel
    r_frob = jnp.zeros((B, 1), jnp.float32)     # Frobenius regularizer channel
    t = jnp.float32(0.5)

    module = RegularizedDensityDynamics(params)
    dx, neg_dlogp, dkin, dfrob = module.forward(t, (x, logp, r_kin, r_frob))
    jax.block_until_ready((dx, neg_dlogp, dkin, dfrob))

    dx_ref, neg_dlogp_ref, dkin_ref, dfrob_ref = _reference_forward(t, x, params)
    assert dx.shape == (B, D) and neg_dlogp.shape == (B, 1)
    assert dkin.shape == (B, 1) and dfrob.shape == (B, 1)
    assert jnp.allclose(dx, dx_ref, rtol=1e-4, atol=1e-4)
    assert jnp.allclose(neg_dlogp, neg_dlogp_ref, rtol=1e-4, atol=1e-4)
    assert jnp.allclose(dkin, dkin_ref, rtol=1e-4, atol=1e-4)
    assert jnp.allclose(dfrob, dfrob_ref, rtol=1e-3, atol=1e-3)

    print("KERNEL_OK")
</pallas_src>

<mosaic_0001>
module attributes {stable_mosaic.version = 11 : i64} {
  func.func @_reg_density_kernel(%arg0: i32, %arg1: memref<1x1xf32, #tpu.memory_space<smem>>, %arg2: memref<8x32xf32, #tpu.memory_space<vmem>>, %arg3: memref<32x128xf32, #tpu.memory_space<vmem>>, %arg4: memref<1x128xf32, #tpu.memory_space<vmem>>, %arg5: memref<1x128xf32, #tpu.memory_space<vmem>>, %arg6: memref<1x128xf32, #tpu.memory_space<vmem>>, %arg7: memref<256x256xf32, #tpu.memory_space<vmem>>, %arg8: memref<1x128xf32, #tpu.memory_space<vmem>>, %arg9: memref<8x128xf32, #tpu.memory_space<vmem>>) attributes {dimension_semantics = [#tpu.dimension_semantics<parallel>], iteration_bounds = array<i64: 2>, scalar_prefetch = 0 : i64, scratch_operands = 0 : i64, tpu.core_type = #tpu.core_type<tc>, window_params = [{transform_indices = @transform_0, window_bounds = array<i64: 1, 1>}, {transform_indices = @transform_1, window_bounds = array<i64: 8, 32>}, {pipeline_mode = #tpu.pipeline_mode<synchronous>, transform_indices = @transform_2, window_bounds = array<i64: 32, 128>}, {pipeline_mode = #tpu.pipeline_mode<synchronous>, transform_indices = @transform_3, window_bounds = array<i64: 1, 128>}, {pipeline_mode = #tpu.pipeline_mode<synchronous>, transform_indices = @transform_4, window_bounds = array<i64: 1, 128>}, {pipeline_mode = #tpu.pipeline_mode<synchronous>, transform_indices = @transform_5, window_bounds = array<i64: 1, 128>}, {pipeline_mode = #tpu.pipeline_mode<synchronous>, transform_indices = @transform_6, window_bounds = array<i64: 256, 256>}, {pipeline_mode = #tpu.pipeline_mode<synchronous>, transform_indices = @transform_7, window_bounds = array<i64: 1, 128>}, {transform_indices = @transform_8, window_bounds = array<i64: 8, 128>}]} {
    %c0 = arith.constant 0 : index
    %c0_0 = arith.constant 0 : index
    %0 = memref.load %arg1[%c0, %c0_0] : memref<1x1xf32, #tpu.memory_space<smem>>
    %c0_1 = arith.constant 0 : index
    %c0_2 = arith.constant 0 : index
    %1 = vector.load %arg2[%c0_1, %c0_2] : memref<8x32xf32, #tpu.memory_space<vmem>>, vector<8x32xf32>
    %c0_3 = arith.constant 0 : index
    %c0_4 = arith.constant 0 : index
    %2 = vector.load %arg3[%c0_3, %c0_4] : memref<32x128xf32, #tpu.memory_space<vmem>>, vector<32x128xf32>
    %cst = arith.constant dense<0.000000e+00> : vector<8x128xf32>
    %3 = tpu.matmul %1, %2, %cst {dimension_numbers = #tpu.dot_dimension_numbers<[1], [0], [0], [1], [0, 0, 1, 1], [], []>} : vector<8x32xf32>, vector<32x128xf32>, vector<8x128xf32> -> vector<8x128xf32>
    %c0_5 = arith.constant 0 : index
    %c0_6 = arith.constant 0 : index
    %4 = vector.load %arg4[%c0_5, %c0_6] : memref<1x128xf32, #tpu.memory_space<vmem>>, vector<1x128xf32>
    %5 = vector.broadcast %0 : f32 to vector<1x128xf32>
    %6 = arith.mulf %5, %4 : vector<1x128xf32>
    %7 = vector.broadcast %6 : vector<1x128xf32> to vector<8x128xf32>
    %8 = arith.addf %3, %7 : vector<8x128xf32>
    %c0_7 = arith.constant 0 : index
    %c0_8 = arith.constant 0 : index
    %9 = vector.load %arg5[%c0_7, %c0_8] : memref<1x128xf32, #tpu.memory_space<vmem>>, vector<1x128xf32>
    %10 = vector.broadcast %9 : vector<1x128xf32> to vector<8x128xf32>
    %11 = arith.addf %8, %10 : vector<8x128xf32>
    %12 = math.tanh %11 : vector<8x128xf32>
    %13 = arith.mulf %12, %12 : vector<8x128xf32>
    %cst_9 = arith.constant 1.000000e+00 : f32
    %14 = vector.broadcast %cst_9 : f32 to vector<8x128xf32>
    %15 = arith.subf %14, %13 : vector<8x128xf32>
    %16 = tpu.concatenate %12, %15 in 1 : vector<8x128xf32>, vector<8x128xf32> -> vector<8x256xf32>
    %c0_10 = arith.constant 0 : index
    %c0_11 = arith.constant 0 : index
    %17 = vector.load %arg7[%c0_10, %c0_11] : memref<256x256xf32, #tpu.memory_space<vmem>>, vector<256x256xf32>
    %cst_12 = arith.constant dense<0.000000e+00> : vector<8x256xf32>
    %18 = tpu.matmul %16, %17, %cst_12 {dimension_numbers = #tpu.dot_dimension_numbers<[1], [0], [0], [1], [0, 0, 1, 1], [], []>} : vector<8x256xf32>, vector<256x256xf32>, vector<8x256xf32> -> vector<8x256xf32>
    %19 = vector.extract_strided_slice %18 {offsets = [0, 0], sizes = [8, 128], strides = [1, 1]} : vector<8x256xf32> to vector<8x128xf32>
    %c0_13 = arith.constant 0 : index
    %c0_14 = arith.constant 0 : index
    %20 = vector.load %arg6[%c0_13, %c0_14] : memref<1x128xf32, #tpu.memory_space<vmem>>, vector<1x128xf32>
    %21 = vector.broadcast %20 : vector<1x128xf32> to vector<8x128xf32>
    %22 = arith.addf %19, %21 : vector<8x128xf32>
    %23 = vector.extract_strided_slice %18 {offsets = [0, 128], sizes = [8, 128], strides = [1, 1]} : vector<8x256xf32> to vector<8x128xf32>
    %c0_15 = arith.constant 0 : index
    %c0_16 = arith.constant 0 : index
    %24 = vector.load %arg8[%c0_15, %c0_16] : memref<1x128xf32, #tpu.memory_space<vmem>>, vector<1x128xf32>
    %25 = vector.broadcast %24 : vector<1x128xf32> to vector<8x128xf32>
    %26 = arith.mulf %15, %25 : vector<8x128xf32>
    %cst_17 = arith.constant dense<0.000000e+00> : vector<8xf32>
    %27 = vector.multi_reduction <add>, %26, %cst_17 [1] : vector<8x128xf32> to vector<8xf32>
    %28 = vector.shape_cast %27 : vector<8xf32> to vector<8x1xf32>
    %29 = arith.mulf %22, %22 : vector<8x128xf32>
    %cst_18 = arith.constant dense<0.000000e+00> : vector<8xf32>
    %30 = vector.multi_reduction <add>, %29, %cst_18 [1] : vector<8x128xf32> to vector<8xf32>
    %31 = vector.shape_cast %30 : vector<8xf32> to vector<8x1xf32>
    %32 = arith.mulf %15, %23 : vector<8x128xf32>
    %cst_19 = arith.constant dense<0.000000e+00> : vector<8xf32>
    %33 = vector.multi_reduction <add>, %32, %cst_19 [1] : vector<8x128xf32> to vector<8xf32>
    %34 = vector.shape_cast %33 : vector<8xf32> to vector<8x1xf32>
    %35 = tpu.iota {dimensions = array<i32: 1>} : vector<8x128xi32>
    %c32_i32 = arith.constant 32 : i32
    %36 = vector.broadcast %c32_i32 : i32 to vector<8x128xi32>
    %37 = arith.subi %35, %36 : vector<8x128xi32>
    %c0_i32 = arith.constant 0 : i32
    %38 = vector.broadcast %c0_i32 : i32 to vector<8x128xi32>
    %39 = arith.cmpi eq, %37, %38 : vector<8x128xi32>
    %cst_20 = arith.constant 0.000000e+00 : f32
    %40 = vector.broadcast %cst_20 : f32 to vector<8x1xf32>
    %41 = arith.subf %40, %28 : vector<8x1xf32>
    %42 = vector.shape_cast %41 : vector<8x1xf32> to vector<8x1xf32>
    %43 = vector.broadcast %42 : vector<8x1xf32> to vector<8x128xf32>
    %44 = arith.select %39, %43, %22 : vector<8x128xi1>, vector<8x128xf32>
    %c1_i32 = arith.constant 1 : i32
    %45 = vector.broadcast %c1_i32 : i32 to vector<8x128xi32>
    %46 = arith.cmpi eq, %37, %45 : vector<8x128xi32>
    %47 = vector.shape_cast %31 : vector<8x1xf32> to vector<8x1xf32>
    %48 = vector.broadcast %47 : vector<8x1xf32> to vector<8x128xf32>
    %49 = arith.select %46, %48, %44 : vector<8x128xi1>, vector<8x128xf32>
    %c2_i32 = arith.constant 2 : i32
    %50 = vector.broadcast %c2_i32 : i32 to vector<8x128xi32>
    %51 = arith.cmpi eq, %37, %50 : vector<8x128xi32>
    %52 = vector.shape_cast %34 : vector<8x1xf32> to vector<8x1xf32>
    %53 = vector.broadcast %52 : vector<8x1xf32> to vector<8x128xf32>
    %54 = arith.select %51, %53, %49 : vector<8x128xi1>, vector<8x128xf32>
    %c0_21 = arith.constant 0 : index
    %c0_22 = arith.constant 0 : index
    %55 = vector.load %arg9[%c0_21, %c0_22] : memref<8x128xf32, #tpu.memory_space<vmem>>, vector<8x128xf32>
    tpu.vector_store %arg9[%c0_21, %c0_22], %54 {strides = array<i32>} : memref<8x128xf32, #tpu.memory_space<vmem>>, vector<8x128xf32>,
    return
  }
  func.func @transform_0(%arg0: i32) -> (i32, i32) {
    %c0_i32 = arith.constant 0 : i32
    %c0_i32_0 = arith.constant 0 : i32
    %c0_i32_1 = arith.constant 0 : i32
    return %c0_i32, %c0_i32_0 : i32, i32
  }
  func.func @transform_1(%arg0: i32) -> (i32, i32) {
    %c0_i32 = arith.constant 0 : i32
    %c0_i32_0 = arith.constant 0 : i32
    return %arg0, %c0_i32 : i32, i32
  }
  func.func @transform_2(%arg0: i32) -> (i32, i32) {
    %c0_i32 = arith.constant 0 : i32
    %c0_i32_0 = arith.constant 0 : i32
    %c0_i32_1 = arith.constant 0 : i32
    return %c0_i32, %c0_i32_0 : i32, i32
  }
  func.func @transform_3(%arg0: i32) -> (i32, i32) {
    %c0_i32 = arith.constant 0 : i32
    %c0_i32_0 = arith.constant 0 : i32
    %c0_i32_1 = arith.constant 0 : i32
    return %c0_i32, %c0_i32_0 : i32, i32
  }
  func.func @transform_4(%arg0: i32) -> (i32, i32) {
    %c0_i32 = arith.constant 0 : i32
    %c0_i32_0 = arith.constant 0 : i32
    %c0_i32_1 = arith.constant 0 : i32
    return %c0_i32, %c0_i32_0 : i32, i32
  }
  func.func @transform_5(%arg0: i32) -> (i32, i32) {
    %c0_i32 = arith.constant 0 : i32
    %c0_i32_0 = arith.constant 0 : i32
    %c0_i32_1 = arith.constant 0 : i32
    return %c0_i32, %c0_i32_0 : i32, i32
  }
  func.func @transform_6(%arg0: i32) -> (i32, i32) {
    %c0_i32 = arith.constant 0 : i32
    %c0_i32_0 = arith.constant 0 : i32
    %c0_i32_1 = arith.constant 0 : i32
    return %c0_i32, %c0_i32_0 : i32, i32
  }
  func.func @transform_7(%arg0: i32) -> (i32, i32) {
    %c0_i32 = arith.constant 0 : i32
    %c0_i32_0 = arith.constant 0 : i32
    %c0_i32_1 = arith.constant 0 : i32
    return %c0_i32, %c0_i32_0 : i32, i32
  }
  func.func @transform_8(%arg0: i32) -> (i32, i32) {
    %c0_i32 = arith.constant 0 : i32
    %c0_i32_0 = arith.constant 0 : i32
    return %arg0, %c0_i32 : i32, i32
  }
}

</mosaic_0001>

<llo_original>
// kernel: _regularized_density_forward.1
$region0: #{_regularized_density_forward.1}
  #allocation0 [shape = 'u32[]', space=smem, size = 0x4, offset = 0x4, fixed_abs, tag = 'smem constant byte address 0x4 - core index']
  #allocation1 [shape = 'u32[144,128]{1,0:T(1,128)}', space=vmem, size = 0x12000, scoped, tag = 'internal scratch']
  #allocation2 [shape = 'f32[1,1]{1,0:T(1,128)S(6)}', space=smem, size = 0x200, scoped, tag = 'scoped memory for _regularized_density_forward.1']
  %s0 = inlined_call_operand.<no memory space> [shape: f32[1,1], index: 0, kind: input, shape index: {}]
  %s1 = inlined_call_operand.hbm [shape: f32[16,32], index: 1, kind: input, shape index: {}]
  %s2 = inlined_call_operand.hbm [shape: f32[32,128], index: 2, kind: input, shape index: {}]
  %s3 = inlined_call_operand.vmem [shape: f32[1,128], index: 3, kind: input, shape index: {}]
  %s4 = inlined_call_operand.vmem [shape: f32[1,128], index: 4, kind: input, shape index: {}]
  %s5 = inlined_call_operand.vmem [shape: f32[1,128], index: 5, kind: input, shape index: {}]
  %s6 = inlined_call_operand.hbm [shape: f32[256,256], index: 6, kind: input, shape index: {}]
  %s7 = inlined_call_operand.vmem [shape: f32[1,128], index: 7, kind: input, shape index: {}]
  %s8 = inlined_call_operand.vmem [shape: f32[16,128], index: 8, kind: output, shape index: {}]
  %s9 = sld [smem:[#allocation0]]
  $region77: #{_regularized_density_forward.1} parent=0
    _
  %s11 = ssub.s32 1, %s9
  %s12 = scalar_select 0, %s11, %s9
  %13 = sst [smem:[#allocation2]] %s0
  $region1: #{_regularized_density_forward.1} parent=0
    #allocation3 [shape = 'u8[8192]{0}', space=vmem, size = 0x2000, scoped, tag = 'input window, operand 1']
    #allocation4 [shape = 's32[2]{0}', space=sflag, size = 0x8, scoped, tag = 'scoped memory for _regularized_density_forward.1']
    #allocation5 [shape = 'u8[16384]{0}', space=vmem, size = 0x4000, scoped, tag = 'input window, operand 2, single buffered']
    #allocation6 [shape = 's32[1]{0}', space=sflag, size = 0x4, scoped, tag = 'scoped memory for _regularized_density_forward.1']
    #allocation7 [shape = 'u8[262144]{0}', space=vmem, size = 0x40000, scoped, tag = 'input window, operand 6, single buffered']
    %14 = vsyncpa [#allocation4], 0
    %s15 = scalar_lea.sflag [#allocation4], 1
    %16 = vsyncpa %s15, 0
    %17 = vsyncpa [#allocation6], 0
    loop: start=0, step=1, limit=4
    $region2: #{_regularized_density_forward.1} parent=1 // loop_pre_header
      _
    $region3: #{_regularized_density_forward.1} parent=1 // loop_header
      %s19 = sphi 0, %s23
      %p20 = scmp.ge.s32.totalorder %s19, 4
      %s27 = sphi 0, %s27
      %s29 = sphi 0, %s27
      %s30 = sphi 0, %s29
      %s44 = sphi 0, %s30
      %s50 = sphi 0, %s52
      %s53 = sphi 0, %s50
      %s54 = sphi 0, %s53
      %s70 = sphi 0, %s54
      %s74 = sphi 0, %s74
      %s76 = sphi 0, %s74
      %s77 = sphi 0, %s76
      %s91 = sphi 0, %s77
      %s95 = sphi 0, %s95
      %s97 = sphi 0, %s95
      %s98 = sphi 0, %s97
      %s112 = sphi 0, %s98
      %s116 = sphi 0, %s116
      %s118 = sphi 0, %s116
      %s119 = sphi 0, %s118
      %s133 = sphi 0, %s119
      %s137 = sphi 0, %s137
      %s139 = sphi 0, %s137
      %s140 = sphi 0, %s139
      %s154 = sphi 0, %s140
      %s158 = sphi 0, %s158
      %s160 = sphi 0, %s158
      %s161 = sphi 0, %s160
      %s175 = sphi 0, %s161
      %s179 = sphi 0, %s179
      %s181 = sphi 0, %s179
      %s182 = sphi 0, %s181
      %s196 = sphi 0, %s182
      %s202 = sphi 0, %s204
      %s205 = sphi 0, %s202
      %s206 = sphi 0, %s205
      %s222 = sphi 0, %s206
    $region4: #{_regularized_density_forward.1} parent=1 // loop_header_branch
      %22 = sbr.rel (%p20) target = $region8
    $region5: #{_regularized_density_forward.1} parent=1 // loop_body
      %s24 = ssub.s32 %s19, 1
      %s25 = ssub.s32 %s19, 2
      %s26 = sadd.s32 %s19, 1
      %s28 = sadd.s32 %s27, 1
      %p31 = scmp.eq.s32.totalorder %s19, 1
      %p32 = scmp.ne.s32.totalorder %s27, %s29
      %p33 = scmp.eq.s32.totalorder %s19, 0
      %p34 = por %p32, %p33
      %p35 = scmp.ne.s32.totalorder %s27, %s29
      %p36 = scmp.eq.s32.totalorder %s24, 1
      %p37 = por %p35, %p36
      %p38 = scmp.ne.s32.totalorder %s29, %s30
      %p39 = scmp.eq.s32.totalorder %s24, 0
      %p40 = por %p38, %p39
      %p41 = scmp.ne.s32.totalorder %s29, %s30
      %p42 = scmp.eq.s32.totalorder %s25, 1
      %p43 = por %p41, %p42
      %p45 = scmp.ne.s32.totalorder %s30, %s44
      %p46 = scmp.eq.s32.totalorder %s25, 0
      %p47 = por %p45, %p46
      %s48 = ssub.s32 %s19, %s26
      %p49 = scmp.eq.s32.totalorder %s48, 0
      %s51 = sadd.s32 %s50, 1
      %s52 = scalar_select %p49, %s50, %s51
      %p55 = pneg %p49
      %p56 = scmp.eq.s32.totalorder %s19, 1
      %p57 = por %p55, %p56
      %p58 = scmp.ne.s32.totalorder %s50, %s53
      %p59 = scmp.eq.s32.totalorder %s19, 0
      %p60 = por %p58, %p59
      %p61 = scmp.ne.s32.totalorder %s50, %s53
      %p62 = scmp.eq.s32.totalorder %s24, 1
      %p63 = por %p61, %p62
      %p64 = scmp.ne.s32.totalorder %s53, %s54
      %p65 = scmp.eq.s32.totalorder %s24, 0
      %p66 = por %p64, %p65
      %p67 = scmp.ne.s32.totalorder %s53, %s54
      %p68 = scmp.eq.s32.totalorder %s25, 1
      %p69 = por %p67, %p68
      %p71 = scmp.ne.s32.totalorder %s54, %s70
      %p72 = scmp.eq.s32.totalorder %s25, 0
      %p73 = por %p71, %p72
      %s75 = sadd.s32 %s74, 1
      %p78 = scmp.eq.s32.totalorder %s19, 1
      %p79 = scmp.ne.s32.totalorder %s74, %s76
      %p80 = scmp.eq.s32.totalorder %s19, 0
      %p81 = por %p79, %p80
      %p82 = scmp.ne.s32.totalorder %s74, %s76
      %p83 = scmp.eq.s32.totalorder %s24, 1
      %p84 = por %p82, %p83
      %p85 = scmp.ne.s32.totalorder %s76, %s77
      %p86 = scmp.eq.s32.totalorder %s24, 0
      %p87 = por %p85, %p86
      %p88 = scmp.ne.s32.totalorder %s76, %s77
      %p89 = scmp.eq.s32.totalorder %s25, 1
      %p90 = por %p88, %p89
      %p92 = scmp.ne.s32.totalorder %s77, %s91
      %p93 = scmp.eq.s32.totalorder %s25, 0
      %p94 = por %p92, %p93
      %s96 = sadd.s32 %s95, 1
      %p99 = scmp.eq.s32.totalorder %s19, 1
      %p100 = scmp.ne.s32.totalorder %s95, %s97
      %p101 = scmp.eq.s32.totalorder %s19, 0
      %p102 = por %p100, %p101
      %p103 = scmp.ne.s32.totalorder %s95, %s97
      %p104 = scmp.eq.s32.totalorder %s24, 1
      %p105 = por %p103, %p104
      %p106 = scmp.ne.s32.totalorder %s97, %s98
      %p107 = scmp.eq.s32.totalorder %s24, 0
      %p108 = por %p106, %p107
      %p109 = scmp.ne.s32.totalorder %s97, %s98
      %p110 = scmp.eq.s32.totalorder %s25, 1
      %p111 = por %p109, %p110
      %p113 = scmp.ne.s32.totalorder %s98, %s112
      %p114 = scmp.eq.s32.totalorder %s25, 0
      %p115 = por %p113, %p114
      %s117 = sadd.s32 %s116, 1
      %p120 = scmp.eq.s32.totalorder %s19, 1
      %p121 = scmp.ne.s32.totalorder %s116, %s118
      %p122 = scmp.eq.s32.totalorder %s19, 0
      %p123 = por %p121, %p122
      %p124 = scmp.ne.s32.totalorder %s116, %s118
      %p125 = scmp.eq.s32.totalorder %s24, 1
      %p126 = por %p124, %p125
      %p127 = scmp.ne.s32.totalorder %s118, %s119
      %p128 = scmp.eq.s32.totalorder %s24, 0
      %p129 = por %p127, %p128
      %p130 = scmp.ne.s32.totalorder %s118, %s119
      %p131 = scmp.eq.s32.totalorder %s25, 1
      %p132 = por %p130, %p131
      %p134 = scmp.ne.s32.totalorder %s119, %s133
      %p135 = scmp.eq.s32.totalorder %s25, 0
      %p136 = por %p134, %p135
      %s138 = sadd.s32 %s137, 1
      %p141 = scmp.eq.s32.totalorder %s19, 1
      %p142 = scmp.ne.s32.totalorder %s137, %s139
      %p143 = scmp.eq.s32.totalorder %s19, 0
      %p144 = por %p142, %p143
      %p145 = scmp.ne.s32.totalorder %s137, %s139
      %p146 = scmp.eq.s32.totalorder %s24, 1
      %p147 = por %p145, %p146
      %p148 = scmp.ne.s32.totalorder %s139, %s140
      %p149 = scmp.eq.s32.totalorder %s24, 0
      %p150 = por %p148, %p149
      %p151 = scmp.ne.s32.totalorder %s139, %s140
      %p152 = scmp.eq.s32.totalorder %s25, 1
      %p153 = por %p151, %p152
      %p155 = scmp.ne.s32.totalorder %s140, %s154
      %p156 = scmp.eq.s32.totalorder %s25, 0
      %p157 = por %p155, %p156
      %s159 = sadd.s32 %s158, 1
      %p162 = scmp.eq.s32.totalorder %s19, 1
      %p163 = scmp.ne.s32.totalorder %s158, %s160
      %p164 = scmp.eq.s32.totalorder %s19, 0
      %p165 = por %p163, %p164
      %p166 = scmp.ne.s32.totalorder %s158, %s160
      %p167 = scmp.eq.s32.totalorder %s24, 1
      %p168 = por %p166, %p167
      %p169 = scmp.ne.s32.totalorder %s160, %s161
      %p170 = scmp.eq.s32.totalorder %s24, 0
      %p171 = por %p169, %p170
      %p172 = scmp.ne.s32.totalorder %s160, %s161
      %p173 = scmp.eq.s32.totalorder %s25, 1
      %p174 = por %p172, %p173
      %p176 = scmp.ne.s32.totalorder %s161, %s175
      %p177 = scmp.eq.s32.totalorder %s25, 0
      %p178 = por %p176, %p177
      %s180 = sadd.s32 %s179, 1
      %p183 = scmp.eq.s32.totalorder %s19, 1
      %p184 = scmp.ne.s32.totalorder %s179, %s181
      %p185 = scmp.eq.s32.totalorder %s19, 0
      %p186 = por %p184, %p185
      %p187 = scmp.ne.s32.totalorder %s179, %s181
      %p188 = scmp.eq.s32.totalorder %s24, 1
      %p189 = por %p187, %p188
      %p190 = scmp.ne.s32.totalorder %s181, %s182
      %p191 = scmp.eq.s32.totalorder %s24, 0
      %p192 = por %p190, %p191
      %p193 = scmp.ne.s32.totalorder %s181, %s182
      %p194 = scmp.eq.s32.totalorder %s25, 1
      %p195 = por %p193, %p194
      %p197 = scmp.ne.s32.totalorder %s182, %s196
      %p198 = scmp.eq.s32.totalorder %s25, 0
      %p199 = por %p197, %p198
      %s200 = ssub.s32 %s19, %s26
      %p201 = scmp.eq.s32.totalorder %s200, 0
      %s203 = sadd.s32 %s202, 1
      %s204 = scalar_select %p201, %s202, %s203
      %p207 = pneg %p201
      %p208 = scmp.eq.s32.totalorder %s19, 1
      %p209 = por %p207, %p208
      %p210 = scmp.ne.s32.totalorder %s202, %s205
      %p211 = scmp.eq.s32.totalorder %s19, 0
      %p212 = por %p210, %p211
      %p213 = scmp.ne.s32.totalorder %s202, %s205
      %p214 = scmp.eq.s32.totalorder %s24, 1
      %p215 = por %p213, %p214
      %p216 = scmp.ne.s32.totalorder %s205, %s206
      %p217 = scmp.eq.s32.totalorder %s24, 0
      %p218 = por %p216, %p217
      %p219 = scmp.ne.s32.totalorder %s205, %s206
      %p220 = scmp.eq.s32.totalorder %s25, 1
      %p221 = por %p219, %p220
      %p223 = scmp.ne.s32.totalorder %s206, %s222
      %p224 = scmp.eq.s32.totalorder %s25, 0
      %p225 = por %p223, %p224
      %p226 = scmp.le.s32.totalorder 1, %s19
      %p227 = scmp.lt.s32.totalorder %s19, 3
      %p228 = pnand %p226, %p227
      %p229 = pneg %p228
      // Predicated region
      $region9: #{_regularized_density_forward.1} parent=5 // pred_check
        _
      $region10: #{_regularized_density_forward.1} parent=5 // pred_check_branch
        %231 = sbr.rel (%p228) target = $region12
      $region11: #{_regularized_density_forward.1} parent=5 // pred_region
        %s232 = ssub.s32 %s19, 1
        // Predicated region
        $region13: #{_regularized_density_forward.1} parent=11 // pred_check
          %p233 = pneg %p40
        $region14: #{_regularized_density_forward.1} parent=11 // pred_check_branch
          %235 = sbr.rel (%p233) target = $region16
        $region15: #{_regularized_density_forward.1} parent=11 // pred_region
          _
        $region16: #{_regularized_density_forward.1} parent=11 // pred_fallthru
          _
        // Predicated region
        $region17: #{_regularized_density_forward.1} parent=11 // pred_check
          %p236 = pneg %p87
        $region18: #{_regularized_density_forward.1} parent=11 // pred_check_branch
          %238 = sbr.rel (%p236) target = $region20
        $region19: #{_regularized_density_forward.1} parent=11 // pred_region
          %s240 = ssub.s32 512, 512
          %241 = vsyncadd [#allocation6], %s240
          %s242 = sshll.u32 [#allocation5], 4
          %s243 = int_to_ptr.vmem [resolvable:$true] %s242
          %248 = dma.hbm_to_vmem [thread:$0]  %s2, 512, %s243, [#allocation6], 128, 128, 8
        $region20: #{_regularized_density_forward.1} parent=11 // pred_fallthru
          _
        // Predicated region
        $region21: #{_regularized_density_forward.1} parent=11 // pred_check
          %p249 = pneg %p108
        $region22: #{_regularized_density_forward.1} parent=11 // pred_check_branch
          %251 = sbr.rel (%p249) target = $region24
        $region23: #{_regularized_density_forward.1} parent=11 // pred_region
          _
        $region24: #{_regularized_density_forward.1} parent=11 // pred_fallthru
          _
        // Predicated region
        $region25: #{_regularized_density_forward.1} parent=11 // pred_check
          %p252 = pneg %p129
        $region26: #{_regularized_density_forward.1} parent=11 // pred_check_branch
          %254 = sbr.rel (%p252) target = $region28
        $region27: #{_regularized_density_forward.1} parent=11 // pred_region
          _
        $region28: #{_regularized_density_forward.1} parent=11 // pred_fallthru
          _
        // Predicated region
        $region29: #{_regularized_density_forward.1} parent=11 // pred_check
          %p255 = pneg %p150
        $region30: #{_regularized_density_forward.1} parent=11 // pred_check_branch
          %257 = sbr.rel (%p255) target = $region32
        $region31: #{_regularized_density_forward.1} parent=11 // pred_region
          _
        $region32: #{_regularized_density_forward.1} parent=11 // pred_fallthru
          _
        // Predicated region
        $region33: #{_regularized_density_forward.1} parent=11 // pred_check
          %p258 = pneg %p171
        $region34: #{_regularized_density_forward.1} parent=11 // pred_check_branch
          %260 = sbr.rel (%p258) target = $region36
        $region35: #{_regularized_density_forward.1} parent=11 // pred_region
          %s262 = ssub.s32 8192, 8192
          %263 = vsyncadd [#allocation6], %s262
          %s264 = sshll.u32 [#allocation7], 4
          %s265 = int_to_ptr.vmem [resolvable:$true] %s264
          %270 = dma.hbm_to_vmem [thread:$0]  %s6, 8192, %s265, [#allocation6], 256, 256, 16
        $region36: #{_regularized_density_forward.1} parent=11 // pred_fallthru
          _
        // Predicated region
        $region37: #{_regularized_density_forward.1} parent=11 // pred_check
          %p271 = pneg %p192
        $region38: #{_regularized_density_forward.1} parent=11 // pred_check_branch
          %273 = sbr.rel (%p271) target = $region40
        $region39: #{_regularized_density_forward.1} parent=11 // pred_region
          _
        $region40: #{_regularized_density_forward.1} parent=11 // pred_fallthru
          _
      $region12: #{_regularized_density_forward.1} parent=5 // pred_fallthru
        _
      %p274 = scmp.lt.s32.totalorder %s19, 2
      // Predicated region
      $region41: #{_regularized_density_forward.1} parent=5 // pred_check
        %p275 = pneg %p274
      $region42: #{_regularized_density_forward.1} parent=5 // pred_check_branch
        %277 = sbr.rel (%p275) target = $region44
      $region43: #{_regularized_density_forward.1} parent=5 // pred_region
        // Predicated region
        $region45: #{_regularized_density_forward.1} parent=43 // pred_check
          %p278 = pneg %p60
        $region46: #{_regularized_density_forward.1} parent=43 // pred_check_branch
          %280 = sbr.rel (%p278) target = $region48
        $region47: #{_regularized_density_forward.1} parent=43 // pred_region
          %s281 = sand.u32 %s50, 1
          %s282 = scalar_lea.sflag [#allocation4], %s281
          %s283 = sand.u32 %s50, 1
          %s284 = smul.addr %s283, 8
          %s285 = scalar_lea.vmem [#allocation3], %s284
          %s287 = ssub.s32 128, 128
          %288 = vsyncadd %s282, %s287
          %s289 = smul.addr %s19, 128
          %s290 = scalar_lea.hbm %s1, %s289
          %s292 = sshll.u32 %s285, 4
          %s293 = int_to_ptr.vmem [resolvable:$true] %s292
          %295 = dma.hbm_to_vmem [thread:$0]  %s290, 128, %s293, %s282
        $region48: #{_regularized_density_forward.1} parent=43 // pred_fallthru
          _
      $region44: #{_regularized_density_forward.1} parent=5 // pred_fallthru
        _
      %p296 = scmp.le.s32.totalorder 1, %s19
      %p297 = scmp.lt.s32.totalorder %s19, 3
      %p298 = pnand %p296, %p297
      %p299 = pneg %p298
      // Predicated region
      $region49: #{_regularized_density_forward.1} parent=5 // pred_check
        _
      $region50: #{_regularized_density_forward.1} parent=5 // pred_check_branch
        %301 = sbr.rel (%p298) target = $region52
      $region51: #{_regularized_density_forward.1} parent=5 // pred_region
        %s302 = ssub.s32 %s19, 1
        %s303 = sand.u32 %s53, 1
        %s304 = scalar_lea.sflag [#allocation4], %s303
        %s305 = sand.u32 %s53, 1
        %s306 = smul.addr %s305, 8
        %s307 = scalar_lea.vmem [#allocation3], %s306
        // Predicated region
        $region53: #{_regularized_density_forward.1} parent=51 // pred_check
          %p308 = pneg %p66
        $region54: #{_regularized_density_forward.1} parent=51 // pred_check_branch
          %310 = sbr.rel (%p308) target = $region56
        $region55: #{_regularized_density_forward.1} parent=51 // pred_region
          %311 = dma.done %s304, 128
        $region56: #{_regularized_density_forward.1} parent=51 // pred_fallthru
          _
        // Predicated region
        $region57: #{_regularized_density_forward.1} parent=51 // pred_check
          %p312 = pneg %p87
        $region58: #{_regularized_density_forward.1} parent=51 // pred_check_branch
          %314 = sbr.rel (%p312) target = $region60
        $region59: #{_regularized_density_forward.1} parent=51 // pred_region
          %315 = dma.done [#allocation6], 512
        $region60: #{_regularized_density_forward.1} parent=51 // pred_fallthru
          _
        // Predicated region
        $region61: #{_regularized_density_forward.1} parent=51 // pred_check
          %p316 = pneg %p171
        $region62: #{_regularized_density_forward.1} parent=51 // pred_check_branch
          %318 = sbr.rel (%p316) target = $region64
        $region63: #{_regularized_density_forward.1} parent=51 // pred_region
          %319 = dma.done [#allocation6], 8192
        $region64: #{_regularized_density_forward.1} parent=51 // pred_fallthru
          _
        %p320 = pneg %p40
        %p321 = pneg %p37
        %s322 = sand.u32 %s53, 1
        %s323 = scalar_lea.sflag [#allocation4], %s322
        %s324 = sand.u32 %s53, 1
        %s325 = smul.addr %s324, 8
        %s326 = scalar_lea.vmem [#allocation3], %s325
        %p327 = pneg %p66
        %p328 = pneg %p63
        %p329 = pneg %p87
        %p330 = pneg %p84
        %p331 = pneg %p108
        %p332 = pneg %p105
        %p333 = pneg %p129
        %p334 = pneg %p126
        %p335 = pneg %p150
        %p336 = pneg %p147
        %p337 = pneg %p171
        %p338 = pneg %p168
        %p339 = pneg %p192
        %p340 = pneg %p189
        %p341 = pneg %p218
        %p342 = pneg %p215
        %p343 = scmp.lt.s32.totalorder %s24, 1
        %s344 = scalar_select %p343, %s24, 1
        %s345 = smul.addr %s344, 8
        %s346 = scalar_lea.vmem %s8, %s345
        %p347 = scmp.lt.s32.totalorder %s24, 1
        %s348 = scalar_select %p347, %s24, 1
        %s349 = smul.addr %s348, 8
        %s350 = scalar_lea.vmem %s8, %s349
        %s351 = sld [smem:[#allocation2]]
        %v352 = vld [vmem:[%s307] sm:$0xff]
        %v353 = vld [vmem:[#allocation5] sm:$0xff]
        %v354 = vld [vmem:[#allocation5 + $0x8] sm:$0xff]
        %v355 = vld [vmem:[#allocation5 + $0x10] sm:$0xff]
        %v356 = vld [vmem:[#allocation5 + $0x18] sm:$0xff]
        %v357 = vld [vmem:[%s3] sm:$0x1]
        %v358 = vstv %s351
        %v359 = vmul.f32 %v358, %v357
        %v361 = vlaneseq
        %v362 = vshrl.u32 %v361, 7
        %v363 = vsub.s32 0, %v362
        %v364 = vrot.slane %v359, %v363
        %vm366 = vcmask 261120
        %v368 = vsel %vm366, %v352, 0
        %370 = vmatprep.subr.mxu0 0.0
        %371 = vmatpush1.msra.mxu0 %v353
        %372 = vmatprep.subr.mxu0 0.0
        %373 = vmatpush1.msra.mxu0 %v354
        %374 = vmatprep.subr.mxu0 0.0
        %375 = vmatpush1.msra.mxu0 %v355
        %376 = vmatprep.subr.mxu0 0.0
        %377 = vmatpush1.msra.mxu0 %v356
        %378 = vmatprep.subr.mxu0 0.0
        %379 = vmatpush1.msra.mxu0 0.0
        %380 = vmatprep.subr.mxu0 0.0
        %381 = vmatpush1.msra.mxu0 0.0
        %382 = vmatprep.subr.mxu0 0.0
        %383 = vmatpush1.msra.mxu0 0.0
        %384 = vmatprep.subr.mxu0 0.0
        %385 = vmatpush1.msra.mxu0 0.0
        %386 = vmatprep.subr.mxu0 0.0
        %387 = vmatpush1.msra.mxu0 0.0
        %388 = vmatprep.subr.mxu0 0.0
        %389 = vmatpush1.msra.mxu0 0.0
        %390 = vmatprep.subr.mxu0 0.0
        %391 = vmatpush1.msra.mxu0 0.0
        %392 = vmatprep.subr.mxu0 0.0
        %393 = vmatpush1.msra.mxu0 0.0
        %394 = vmatprep.subr.mxu0 0.0
        %395 = vmatpush1.msra.mxu0 0.0
        %396 = vmatprep.subr.mxu0 0.0
        %397 = vmatpush1.msra.mxu0 0.0
        %398 = vmatprep.subr.mxu0 0.0
        %399 = vmatpush1.msra.mxu0 0.0
        %400 = vmatprep.subr.mxu0 0.0
        %401 = vmatpush1.msra.mxu0 0.0
        %402 = vmatprep.subr.mxu0 0.0
        %403 = vmatpush1.msra.mxu0 0.0
        %404 = vmatprep.subr.mxu0 0.0
        %405 = vmatpush1.msra.mxu0 0.0
        %406 = vmatprep.subr.mxu0 0.0
        %407 = vmatpush1.msra.mxu0 0.0
        %408 = vmatprep.subr.mxu0 0.0
        %409 = vmatpush1.msra.mxu0 0.0
        %410 = vmatprep.subr.mxu0 0.0
        %411 = vmatpush1.msra.mxu0 0.0
        %412 = vmatprep.subr.mxu0 0.0
        %413 = vmatpush1.msra.mxu0 0.0
        %414 = vmatprep.subr.mxu0 0.0
        %415 = vmatpush1.msra.mxu0 0.0
        %416 = vmatprep.subr.mxu0 0.0
        %417 = vmatpush1.msra.mxu0 0.0
        %418 = vmatprep.subr.mxu0 0.0
        %419 = vmatpush1.msra.mxu0 0.0
        %420 = vmatprep.subr.mxu0 0.0
        %421 = vmatpush1.msra.mxu0 0.0
        %422 = vmatprep.subr.mxu0 0.0
        %423 = vmatpush1.msra.mxu0 0.0
        %424 = vmatprep.subr.mxu0 0.0
        %425 = vmatpush1.msra.mxu0 0.0
        %426 = vmatprep.subr.mxu0 0.0
        %427 = vmatpush1.msra.mxu0 0.0
        %428 = vmatprep.subr.mxu0 0.0
        %429 = vmatpush1.msra.mxu0 0.0
        %430 = vmatprep.subr.mxu0 0.0
        %431 = vmatpush1.msra.mxu0 0.0
        %432 = vmatprep.subr.mxu0 0.0
        %433 = vmatpush1.msra.mxu0 0.0
        %434 = vmatprep.mubr.f32.mxu0 0.0
        %435 = vmatmul.mubr.f32.gmra.mrb[0].mxu0 %v368
        %v436 = vpop.f32.mrb[0].mxu0
        %v437 = vadd.f32 %v364, %v436
        %v438 = vpop.f32.mrb[0].mxu0
        %439 = vdwg.mxu0
        %v440 = vld [vmem:[%s4] sm:$0x1]
        %v442 = vlaneseq
        %v443 = vshrl.u32 %v442, 7
        %v444 = vsub.s32 0, %v443
        %v445 = vrot.slane %v440, %v444
        %v447 = vadd.f32 %v437, %v445
        %v448 = vtanh.pop %v447
        %v449 = vmul.f32 %v448, %v448
        %v450 = vsub.f32 1.0, %v449
        %v451 = vld [vmem:[#allocation7] sm:$0xff]
        %v452 = vld [vmem:[#allocation7 + $0x8] sm:$0xff]
        %v453 = vld [vmem:[#allocation7 + $0x10] sm:$0xff]
        %v454 = vld [vmem:[#allocation7 + $0x18] sm:$0xff]
        %v455 = vld [vmem:[#allocation7 + $0x20] sm:$0xff]
        %v456 = vld [vmem:[#allocation7 + $0x28] sm:$0xff]
        %v457 = vld [vmem:[#allocation7 + $0x30] sm:$0xff]
        %v458 = vld [vmem:[#allocation7 + $0x38] sm:$0xff]
        %v459 = vld [vmem:[#allocation7 + $0x40] sm:$0xff]
        %v460 = vld [vmem:[#allocation7 + $0x48] sm:$0xff]
        %v461 = vld [vmem:[#allocation7 + $0x50] sm:$0xff]
        %v462 = vld [vmem:[#allocation7 + $0x58] sm:$0xff]
        %v463 = vld [vmem:[#allocation7 + $0x60] sm:$0xff]
        %v464 = vld [vmem:[#allocation7 + $0x68] sm:$0xff]
        %v465 = vld [vmem:[#allocation7 + $0x70] sm:$0xff]
        %v466 = vld [vmem:[#allocation7 + $0x78] sm:$0xff]
        %v467 = vld [vmem:[#allocation7 + $0x80] sm:$0xff]
        %v468 = vld [vmem:[#allocation7 + $0x88] sm:$0xff]
        %v469 = vld [vmem:[#allocation7 + $0x90] sm:$0xff]
        %v470 = vld [vmem:[#allocation7 + $0x98] sm:$0xff]
        %v471 = vld [vmem:[#allocation7 + $0xa0] sm:$0xff]
        %v472 = vld [vmem:[#allocation7 + $0xa8] sm:$0xff]
        %v473 = vld [vmem:[#allocation7 + $0xb0] sm:$0xff]
        %v474 = vld [vmem:[#allocation7 + $0xb8] sm:$0xff]
        %v475 = vld [vmem:[#allocation7 + $0xc0] sm:$0xff]
        %v476 = vld [vmem:[#allocation7 + $0xc8] sm:$0xff]
        %v477 = vld [vmem:[#allocation7 + $0xd0] sm:$0xff]
        %v478 = vld [vmem:[#allocation7 + $0xd8] sm:$0xff]
        %v479 = vld [vmem:[#allocation7 + $0xe0] sm:$0xff]
        %v480 = vld [vmem:[#allocation7 + $0xe8] sm:$0xff]
        %v481 = vld [vmem:[#allocation7 + $0xf0] sm:$0xff]
        %v482 = vld [vmem:[#allocation7 + $0xf8] sm:$0xff]
        %v483 = vld [vmem:[#allocation7 + $0x100] sm:$0xff]
        %v484 = vld [vmem:[#allocation7 + $0x108] sm:$0xff]
        %v485 = vld [vmem:[#allocation7 + $0x110] sm:$0xff]
        %v486 = vld [vmem:[#allocation7 + $0x118] sm:$0xff]
        %v487 = vld [vmem:[#allocation7 + $0x120] sm:$0xff]
        %v488 = vld [vmem:[#allocation7 + $0x128] sm:$0xff]
        %v489 = vld [vmem:[#allocation7 + $0x130] sm:$0xff]
        %v490 = vld [vmem:[#allocation7 + $0x138] sm:$0xff]
        %v491 = vld [vmem:[#allocation7 + $0x140] sm:$0xff]
        %v492 = vld [vmem:[#allocation7 + $0x148] sm:$0xff]
        %v493 = vld [vmem:[#allocation7 + $0x150] sm:$0xff]
        %v494 = vld [vmem:[#allocation7 + $0x158] sm:$0xff]
        %v495 = vld [vmem:[#allocation7 + $0x160] sm:$0xff]
        %v496 = vld [vmem:[#allocation7 + $0x168] sm:$0xff]
        %v497 = vld [vmem:[#allocation7 + $0x170] sm:$0xff]
        %v498 = vld [vmem:[#allocation7 + $0x178] sm:$0xff]
        %v499 = vld [vmem:[#allocation7 + $0x180] sm:$0xff]
        %v500 = vld [vmem:[#allocation7 + $0x188] sm:$0xff]
        %v501 = vld [vmem:[#allocation7 + $0x190] sm:$0xff]
        %v502 = vld [vmem:[#allocation7 + $0x198] sm:$0xff]
        %v503 = vld [vmem:[#allocation7 + $0x1a0] sm:$0xff]
        %v504 = vld [vmem:[#allocation7 + $0x1a8] sm:$0xff]
        %v505 = vld [vmem:[#allocation7 + $0x1b0] sm:$0xff]
        %v506 = vld [vmem:[#allocation7 + $0x1b8] sm:$0xff]
        %v507 = vld [vmem:[#allocation7 + $0x1c0] sm:$0xff]
        %v508 = vld [vmem:[#allocation7 + $0x1c8] sm:$0xff]
        %v509 = vld [vmem:[#allocation7 + $0x1d0] sm:$0xff]
        %v510 = vld [vmem:[#allocation7 + $0x1d8] sm:$0xff]
        %v511 = vld [vmem:[#allocation7 + $0x1e0] sm:$0xff]
        %v512 = vld [vmem:[#allocation7 + $0x1e8] sm:$0xff]
        %v513 = vld [vmem:[#allocation7 + $0x1f0] sm:$0xff]
        %v514 = vld [vmem:[#allocation7 + $0x1f8] sm:$0xff]
        %515 = vmatprep.subr.mxu0 %v452
        %516 = vmatpush1.msra.mxu0 %v451
        %517 = vmatprep.subr.mxu0 %v454
        %518 = vmatpush1.msra.mxu0 %v453
        %519 = vmatprep.subr.mxu0 %v456
        %520 = vmatpush1.msra.mxu0 %v455
        %521 = vmatprep.subr.mxu0 %v458
        %522 = vmatpush1.msra.mxu0 %v457
        %523 = vmatprep.subr.mxu0 %v460
        %524 = vmatpush1.msra.mxu0 %v459
        %525 = vmatprep.subr.mxu0 %v462
        %526 = vmatpush1.msra.mxu0 %v461
        %527 = vmatprep.subr.mxu0 %v464
        %528 = vmatpush1.msra.mxu0 %v463
        %529 = vmatprep.subr.mxu0 %v466
        %530 = vmatpush1.msra.mxu0 %v465
        %531 = vmatprep.subr.mxu0 %v468
        %532 = vmatpush1.msra.mxu0 %v467
        %533 = vmatprep.subr.mxu0 %v470
        %534 = vmatpush1.msra.mxu0 %v469
        %535 = vmatprep.subr.mxu0 %v472
        %536 = vmatpush1.msra.mxu0 %v471
        %537 = vmatprep.subr.mxu0 %v474
        %538 = vmatpush1.msra.mxu0 %v473
        %539 = vmatprep.subr.mxu0 %v476
        %540 = vmatpush1.msra.mxu0 %v475
        %541 = vmatprep.subr.mxu0 %v478
        %542 = vmatpush1.msra.mxu0 %v477
        %543 = vmatprep.subr.mxu0 %v480
        %544 = vmatpush1.msra.mxu0 %v479
        %545 = vmatprep.subr.mxu0 %v482
        %546 = vmatpush1.msra.mxu0 %v481
        %547 = vmatprep.subr.mxu0 %v484
        %548 = vmatpush1.msra.mxu0 %v483
        %549 = vmatprep.subr.mxu0 %v486
        %550 = vmatpush1.msra.mxu0 %v485
        %551 = vmatprep.subr.mxu0 %v488
        %552 = vmatpush1.msra.mxu0 %v487
        %553 = vmatprep.subr.mxu0 %v490
        %554 = vmatpush1.msra.mxu0 %v489
        %555 = vmatprep.subr.mxu0 %v492
        %556 = vmatpush1.msra.mxu0 %v491
        %557 = vmatprep.subr.mxu0 %v494
        %558 = vmatpush1.msra.mxu0 %v493
        %559 = vmatprep.subr.mxu0 %v496
        %560 = vmatpush1.msra.mxu0 %v495
        %561 = vmatprep.subr.mxu0 %v498
        %562 = vmatpush1.msra.mxu0 %v497
        %563 = vmatprep.subr.mxu0 %v500
        %564 = vmatpush1.msra.mxu0 %v499
        %565 = vmatprep.subr.mxu0 %v502
        %566 = vmatpush1.msra.mxu0 %v501
        %567 = vmatprep.subr.mxu0 %v504
        %568 = vmatpush1.msra.mxu0 %v503
        %569 = vmatprep.subr.mxu0 %v506
        %570 = vmatpush1.msra.mxu0 %v505
        %571 = vmatprep.subr.mxu0 %v508
        %572 = vmatpush1.msra.mxu0 %v507
        %573 = vmatprep.subr.mxu0 %v510
        %574 = vmatpush1.msra.mxu0 %v509
        %575 = vmatprep.subr.mxu0 %v512
        %576 = vmatpush1.msra.mxu0 %v511
        %577 = vmatprep.subr.mxu0 %v514
        %578 = vmatpush1.msra.mxu0 %v513
        %579 = vmatprep.mubr.f32.mxu0 %v450
        %580 = vmatmul.mubr.f32.gmra.mrb[0].mxu0 %v448
        %v581 = vpop.f32.mrb[0].mxu0
        %v582 = vadd.f32 0.0, %v581
        %v583 = vpop.f32.mrb[0].mxu0
        %v584 = vadd.f32 0.0, %v583
        %585 = vdwg.mxu0
        %v586 = vld [vmem:[%s5] sm:$0x1]
        %v588 = vlaneseq
        %v589 = vshrl.u32 %v588, 7
        %v590 = vsub.s32 0, %v589
        %v591 = vrot.slane %v586, %v590
        %v593 = vadd.f32 %v582, %v591
        %v594 = vld [vmem:[%s7] sm:$0x1]
        %v596 = vlaneseq
        %v597 = vshrl.u32 %v596, 7
        %v598 = vsub.s32 0, %v597
        %v599 = vrot.slane %v594, %v598
        %v601 = vmul.f32 %v450, %v599
        %602 = vadd.xlane.f32.xlu0 %v601
        %v603 = vpop.xlane.xlu0 %602
        %v604 = vmul.f32 %v593, %v593
        %605 = vadd.xlane.f32.xlu0 %v604
        %v606 = vpop.xlane.xlu0 %605
        %v607 = vmul.f32 %v450, %v584
        %608 = vadd.xlane.f32.xlu0 %v607
        %v609 = vpop.xlane.xlu0 %608
        %v610 = vlaneseq
        %v611 = vand.u32 %v610, 127
        %v612 = vsub.s32 %v611, 32
        %vm613 = vcmp.eq.s32.totalorder %v612, 0
        %v614 = vsub.f32 0.0, %v603
        %v615 = vsel %vm613, %v614, %v593
        %vm616 = vcmp.eq.s32.totalorder %v612, 1
        %v617 = vsel %vm616, %v606, %v615
        %vm618 = vcmp.eq.s32.totalorder %v612, 2
        %v619 = vsel %vm618, %v609, %v617
        %620 = vst [vmem:[%s350] sm:$0xff] %v619
        %p621 = scmp.lt.s32.totalorder %s24, 1
        %s622 = scalar_select %p621, %s24, 1
        %s623 = smul.addr %s622, 8
        %s624 = scalar_lea.vmem %s8, %s623
        // Predicated region
        $region65: #{_regularized_density_forward.1} parent=51 // pred_check
          %p625 = pneg %p215
        $region66: #{_regularized_density_forward.1} parent=51 // pred_check_branch
          %627 = sbr.rel (%p625) target = $region68
        $region67: #{_regularized_density_forward.1} parent=51 // pred_region
          _
        $region68: #{_regularized_density_forward.1} parent=51 // pred_fallthru
          _
      $region52: #{_regularized_density_forward.1} parent=5 // pred_fallthru
        _
      %p628 = scmp.le.s32.totalorder 2, %s19
      // Predicated region
      $region69: #{_regularized_density_forward.1} parent=5 // pred_check
        %p629 = pneg %p628
      $region70: #{_regularized_density_forward.1} parent=5 // pred_check_branch
        %631 = sbr.rel (%p629) target = $region72
      $region71: #{_regularized_density_forward.1} parent=5 // pred_region
        %s632 = ssub.s32 %s19, 2
        // Predicated region
        $region73: #{_regularized_density_forward.1} parent=71 // pred_check
          %p633 = pneg %p221
        $region74: #{_regularized_density_forward.1} parent=71 // pred_check_branch
          %635 = sbr.rel (%p633) target = $region76
        $region75: #{_regularized_density_forward.1} parent=71 // pred_region
          %p636 = scmp.lt.s32.totalorder %s25, 1
          %s637 = scalar_select %p636, %s25, 1
          %s638 = smul.addr %s637, 8
          %s639 = scalar_lea.vmem %s8, %s638
        $region76: #{_regularized_density_forward.1} parent=71 // pred_fallthru
          _
      $region72: #{_regularized_density_forward.1} parent=5 // pred_fallthru
        _
    $region6: #{_regularized_density_forward.1} parent=1 // loop_footer
      %s23 = sadd.s32 1, %s19
    $region7: #{_regularized_density_forward.1} parent=1 // loop_footer_branch
      %18 = sbr.rel target = $region3
    $region8: #{_regularized_density_forward.1} parent=1 // loop_exit
      _
    %640 = vsyncpa [#allocation4], 1
    %s641 = scalar_lea.sflag [#allocation4], 1
    %642 = vsyncpa %s641, 1
    %643 = vsyncpa [#allocation6], 1

</llo_original>
